<compile_context>
chip_gen: v7x
topology: tpu7x:2x2x1
jax: 0.10.0
libtpu: 0.0.40
codegen_flags: <defaults>
</compile_context>

<pallas_src>
import functools

import jax
import jax.numpy as jnp
from jax.experimental import pallas as pl
from jax.experimental.pallas import tpu as pltpu


def _round_up(x, m):
    return (x + m - 1) // m * m


# --------------------------------------------------------------------------- #
# Hardware / dtype helpers                                                     #
# --------------------------------------------------------------------------- #
def _vmem_capacity_bytes():
    try:
        return int(pltpu.get_tpu_info().vmem_capacity_bytes)
    except Exception:
        return 64 * 1024 * 1024  # conservative (v7x per-TC) fallback


def _is_v5e_device():
    try:
        kind = jax.devices()[0].device_kind.lower()
        return ("v5 lite" in kind) or ("v5e" in kind) or ("v5litepod" in kind)
    except Exception:
        return False


def _default_compute_dtype(dtype):
    # v5e: f32 MXU passes are slow and HBM is ~820 GB/s -> bf16 operands
    # (with f32 accumulation) for the two matmuls; other chips keep native dtype.
    if jnp.dtype(dtype) == jnp.float32 and _is_v5e_device():
        return jnp.dtype(jnp.bfloat16)
    return jnp.dtype(dtype)


# --------------------------------------------------------------------------- #
# Tile selection                                                               #
# --------------------------------------------------------------------------- #
def _vmem_need(tm, th, E, itemsize):
    """Estimate of kernel VMEM footprint (buffers + scratch + f32 temporaries)."""
    El = _round_up(E, 128)
    act = 2 * 2 * tm * El * itemsize          # x + out tiles, double-buffered
    wgt = 2 * 3 * El * th * itemsize          # W1 + W2 blocks, up to 3-deep
    bia = 2 * 8 * (th + El) * itemsize        # bias blocks pad to 8 sublanes
    acc = tm * El * 4                         # f32 accumulator scratch
    tmp = 4 * tm * th * 4                     # h / GELU-chain f32 temporaries
    return act + wgt + bia + acc + tmp


def _choose_tiles(N, E, H, itemsize, budget):
    """Pick (tm, th): MXU-aligned, fitting in `budget` bytes of VMEM."""
    sub = {4: 8, 2: 16, 1: 32}.get(itemsize, 8)   # dtype-native sublane multiple

    # ---- token tile ----
    tm = min(1024, _round_up(N, sub))
    if tm >= 256:
        tm = _round_up(tm, 256)
    # v7x has 2 TensorCores; make sure the parallel token axis has >= 2 steps.
    if N >= 512 and tm >= N:
        tm = max(256, _round_up((N + 1) // 2, 256))

    # ---- hidden tile candidates (prefer >= 512, prefer exact divisors of H) ----
    if H <= 1024:
        th_cands = [_round_up(H, 128)]
    else:
        divisors = [c for c in (2048, 1024, 512) if H % c == 0]
        th_cands = divisors if divisors else [512]   # pad H up to a 512 multiple

    # Search: big th first; if nothing fits, shrink tm before dropping th < 512.
    tm_try = tm
    while True:
        for c in th_cands:
            if _vmem_need(tm_try, c, E, itemsize) <= budget:
                return tm_try, c
        if tm_try <= 256:
            break
        tm_try = max(256, _round_up(tm_try // 2, 256))

    for c in (256, 128):  # last resort for very large E on small-VMEM chips
        if _vmem_need(tm_try, c, E, itemsize) <= budget:
            return tm_try, c
    return tm_try, 128


def _maybe_buffered_spec(block_shape, index_map, deep):
    """Weight BlockSpec; 3-deep pipelining when the reduction is long enough."""
    if deep:
        try:
            return pl.BlockSpec(block_shape, index_map,
                                pipeline_mode=pl.Buffered(3))
        except Exception:  # pipeline_mode / Buffered unavailable on this version
            pass
    return pl.BlockSpec(block_shape, index_map)


# --------------------------------------------------------------------------- #
# Kernel                                                                       #
# --------------------------------------------------------------------------- #
def _ffn_kernel(x_ref, w1_ref, b1_ref, w2_ref, b2_ref, o_ref, acc_ref):
    # x_ref: (tm, E)   w1_ref: (E, th)   b1_ref: (1, th)
    # w2_ref: (th, E)  b2_ref: (1, E)    o_ref: (tm, E)   acc_ref: (tm, E) f32
    k = pl.program_id(1)

    # fc1 on this hidden chunk: compute-dtype operands, f32 MXU accumulation.
    h = jnp.dot(x_ref[...], w1_ref[...], preferred_element_type=jnp.float32)
    h = h + b1_ref[...].astype(jnp.float32)

    # Exact (erf) GELU, matching nn.GELU() default.
    h = 0.5 * h * (1.0 + jax.lax.erf(h * jnp.float32(0.7071067811865476)))

    # Partial fc2 contribution from this hidden chunk.
    part = jnp.dot(h.astype(w2_ref.dtype), w2_ref[...],
                   preferred_element_type=jnp.float32)

    @pl.when(k == 0)
    def _():
        acc_ref[...] = b2_ref[...].astype(jnp.float32) + part

    @pl.when(k > 0)
    def _():
        acc_ref[...] += part

    @pl.when(k == pl.num_programs(1) - 1)
    def _():
        # dropout(p=0.0) == identity (module default).
        # TODO(synk): dropout with p > 0 (training mode) is not implemented.
        o_ref[...] = acc_ref[...].astype(o_ref.dtype)


# --------------------------------------------------------------------------- #
# Wrapper                                                                      #
# --------------------------------------------------------------------------- #
@functools.partial(jax.jit, static_argnames=("tm", "th", "compute_dtype"))
def feed_forward(x, w1, b1, w2, b2, *, tm=None, th=None, compute_dtype=None):
    """x: [B, S, E]; w1: [E, H]; b1: [H]; w2: [H, E]; b2: [E]."""
    B, S, E = x.shape
    H = w1.shape[1]
    N = B * S

    if compute_dtype is None:
        compute_dtype = _default_compute_dtype(x.dtype)
    compute_dtype = jnp.dtype(compute_dtype)
    itemsize = compute_dtype.itemsize

    cap_bytes = _vmem_capacity_bytes()
    budget = int(0.70 * cap_bytes)
    tm_auto, th_auto = _choose_tiles(N, E, H, itemsize, budget)
    tm = tm_auto if tm is None else tm
    th = th_auto if th is None else th

    # Pad the hidden dim (weights only). gelu(0 + 0) = 0, so padded hidden
    # units contribute exactly zero to the output.
    Hp = _round_up(H, th)
    if Hp != H:
        w1p = jnp.pad(w1, ((0, 0), (0, Hp - H)))
        b1p = jnp.pad(b1, ((0, Hp - H),))
        w2p = jnp.pad(w2, ((0, Hp - H), (0, 0)))
    else:
        w1p, b1p, w2p = w1, b1, w2

    x2 = x.reshape(N, E).astype(compute_dtype)
    w1p = w1p.astype(compute_dtype)
    w2p = w2p.astype(compute_dtype)
    b1_2 = b1p.reshape(1, Hp)
    b2_2 = b2.reshape(1, E)

    n_i = pl.cdiv(N, tm)          # token tiles (boundary tile handled by masking)
    n_k = Hp // th                # hidden-dim reduction steps

    need = _vmem_need(tm, th, E, itemsize)
    vmem_limit = min(int(0.90 * cap_bytes),
                     max(int(1.3 * need), 32 * 1024 * 1024))

    cost = pl.CostEstimate(
        flops=4 * N * E * Hp,                       # two matmuls: 2*N*E*Hp each
        transcendentals=N * Hp,                     # erf
        bytes_accessed=(2 * N * E * itemsize        # x read + out write
                        + n_i * (2 * E * Hp + Hp + E) * itemsize),  # weight streams
    )

    deep_weights = n_k > 2
    w1_spec = _maybe_buffered_spec((E, th), lambda i, k: (0, k), deep_weights)
    w2_spec = _maybe_buffered_spec((th, E), lambda i, k: (k, 0), deep_weights)

    out2 = pl.pallas_call(
        _ffn_kernel,
        out_shape=jax.ShapeDtypeStruct((N, E), x.dtype),
        grid_spec=pltpu.PrefetchScalarGridSpec(
            num_scalar_prefetch=0,
            grid=(n_i, n_k),
            in_specs=[
                pl.BlockSpec((tm, E), lambda i, k: (i, 0)),   # x tile (resident over k)
                w1_spec,                                      # W1 column chunk
                pl.BlockSpec((1, th), lambda i, k: (0, k)),   # b1 chunk
                w2_spec,                                      # W2 row chunk
                pl.BlockSpec((1, E), lambda i, k: (0, 0)),    # b2
            ],
            out_specs=pl.BlockSpec((tm, E), lambda i, k: (i, 0)),
            scratch_shapes=[pltpu.VMEM((tm, E), jnp.float32)],
        ),
        compiler_params=pltpu.CompilerParams(
            dimension_semantics=("parallel", "arbitrary"),
            vmem_limit_bytes=vmem_limit,
        ),
        cost_estimate=cost,
    )(x2, w1p, b1_2, w2p, b2_2)

    return out2.reshape(B, S, E)


# --------------------------------------------------------------------------- #
# Reference & self-test                                                        #
# --------------------------------------------------------------------------- #
def _reference(x, w1, b1, w2, b2):
    h = jnp.dot(x.astype(jnp.float32), w1.astype(jnp.float32)) + b1
    h = 0.5 * h * (1.0 + jax.lax.erf(h / jnp.sqrt(jnp.float32(2.0))))
    return (jnp.dot(h, w2.astype(jnp.float32)) + b2).astype(x.dtype)


if __name__ == "__main__":
    keys = jax.random.split(jax.random.PRNGKey(0), 15)

    # Tolerance depends on whether the auto compute dtype is bf16 (v5e) or f32.
    cdt = _default_compute_dtype(jnp.float32)
    tol = 1e-4 if cdt == jnp.dtype(jnp.float32) else 3e-2

    # 1) Small shapes consistent with the module: batch=2, seq=8, embed_dim=32, expansion=4.
    B, S, E, EXP = 2, 8, 32, 4
    H = E * EXP
    x = jax.random.normal(keys[0], (B, S, E), dtype=jnp.float32)
    w1 = jax.random.normal(keys[1], (E, H), dtype=jnp.float32) * (1.0 / jnp.sqrt(E))
    b1 = jax.random.normal(keys[2], (H,), dtype=jnp.float32) * 0.01
    w2 = jax.random.normal(keys[3], (H, E), dtype=jnp.float32) * (1.0 / jnp.sqrt(H))
    b2 = jax.random.normal(keys[4], (E,), dtype=jnp.float32) * 0.01

    out = jax.block_until_ready(feed_forward(x, w1, b1, w2, b2))
    ref = _reference(x, w1, b1, w2, b2)
    assert out.shape == (B, S, E)
    assert jnp.allclose(out, ref, atol=tol, rtol=tol), "mismatch vs reference"

    # 2) Exercises the H-tiled reduction (th=128 -> 2 k-steps) and the masked
    #    partial token tile (B*S=5 not a multiple of the token tile).
    E2, H2 = 32, 256
    x_b = jax.random.normal(keys[5], (1, 5, E2), dtype=jnp.float32)
    w1_b = jax.random.normal(keys[6], (E2, H2), dtype=jnp.float32) * (1.0 / jnp.sqrt(E2))
    b1_b = jax.random.normal(keys[7], (H2,), dtype=jnp.float32) * 0.01
    w2_b = jax.random.normal(keys[8], (H2, E2), dtype=jnp.float32) * (1.0 / jnp.sqrt(H2))
    b2_b = jax.random.normal(keys[9], (E2,), dtype=jnp.float32) * 0.01

    out_b = jax.block_until_ready(feed_forward(x_b, w1_b, b1_b, w2_b, b2_b, th=128))
    ref_b = _reference(x_b, w1_b, b1_b, w2_b, b2_b)
    assert out_b.shape == (1, 5, E2)
    assert jnp.allclose(out_b, ref_b, atol=tol, rtol=tol), "mismatch vs reference (tiled H)"

    # 3) Mid-size: exercises the auto tile chooser splitting the token axis
    #    into >= 2 parallel steps (both v7x TensorCores get work).
    E3, H3, B3, S3 = 128, 512, 4, 128
    x_c = jax.random.normal(keys[10], (B3, S3, E3), dtype=jnp.float32)
    w1_c = jax.random.normal(keys[11], (E3, H3), dtype=jnp.float32) * (1.0 / jnp.sqrt(E3))
    b1_c = jax.random.normal(keys[12], (H3,), dtype=jnp.float32) * 0.01
    w2_c = jax.random.normal(keys[13], (H3, E3), dtype=jnp.float32) * (1.0 / jnp.sqrt(H3))
    b2_c = jax.random.normal(keys[14], (E3,), dtype=jnp.float32) * 0.01

    out_c = jax.block_until_ready(feed_forward(x_c, w1_c, b1_c, w2_c, b2_c))
    ref_c = _reference(x_c, w1_c, b1_c, w2_c, b2_c)
    assert out_c.shape == (B3, S3, E3)
    assert jnp.allclose(out_c, ref_c, atol=tol, rtol=tol), "mismatch vs reference (mid)"

    print("KERNEL_OK")
</pallas_src>

<mosaic_0001>
module attributes {stable_mosaic.version = 11 : i64} {
  func.func @_ffn_kernel(%arg0: i32, %arg1: i32, %arg2: memref<16x32xf32, #tpu.memory_space<vmem>>, %arg3: memref<32x128xf32, #tpu.memory_space<vmem>>, %arg4: memref<1x128xf32, #tpu.memory_space<vmem>>, %arg5: memref<128x32xf32, #tpu.memory_space<vmem>>, %arg6: memref<1x32xf32, #tpu.memory_space<vmem>>, %arg7: memref<16x32xf32, #tpu.memory_space<vmem>>, %arg8: memref<16x32xf32, #tpu.memory_space<vmem>>) attributes {dimension_semantics = [#tpu.dimension_semantics<parallel>, #tpu.dimension_semantics<arbitrary>], iteration_bounds = array<i64: 1, 1>, scalar_prefetch = 0 : i64, scratch_operands = 1 : i64, tpu.core_type = #tpu.core_type<tc>, window_params = [{transform_indices = @transform_0, window_bounds = array<i64: 16, 32>}, {transform_indices = @transform_1, window_bounds = array<i64: 32, 128>}, {transform_indices = @transform_2, window_bounds = array<i64: 1, 128>}, {transform_indices = @transform_3, window_bounds = array<i64: 128, 32>}, {pipeline_mode = #tpu.pipeline_mode<synchronous>, transform_indices = @transform_4, window_bounds = array<i64: 1, 32>}, {transform_indices = @transform_5, window_bounds = array<i64: 16, 32>}]} {
    %c0 = arith.constant 0 : index
    %c0_0 = arith.constant 0 : index
    %0 = vector.load %arg2[%c0, %c0_0] : memref<16x32xf32, #tpu.memory_space<vmem>>, vector<16x32xf32>
    %c0_1 = arith.constant 0 : index
    %c0_2 = arith.constant 0 : index
    %1 = vector.load %arg3[%c0_1, %c0_2] : memref<32x128xf32, #tpu.memory_space<vmem>>, vector<32x128xf32>
    %cst = arith.constant dense<0.000000e+00> : vector<16x128xf32>
    %2 = tpu.matmul %0, %1, %cst {dimension_numbers = #tpu.dot_dimension_numbers<[1], [0], [0], [1], [0, 0, 1, 1], [], []>} : vector<16x32xf32>, vector<32x128xf32>, vector<16x128xf32> -> vector<16x128xf32>
    %c0_3 = arith.constant 0 : index
    %c0_4 = arith.constant 0 : index
    %3 = vector.load %arg4[%c0_3, %c0_4] : memref<1x128xf32, #tpu.memory_space<vmem>>, vector<1x128xf32>
    %4 = vector.broadcast %3 : vector<1x128xf32> to vector<16x128xf32>
    %5 = arith.addf %2, %4 : vector<16x128xf32>
    %cst_5 = arith.constant 5.000000e-01 : f32
    %6 = vector.broadcast %cst_5 : f32 to vector<16x128xf32>
    %7 = arith.mulf %6, %5 : vector<16x128xf32>
    %cst_6 = arith.constant 0.707106769 : f32
    %8 = vector.broadcast %cst_6 : f32 to vector<16x128xf32>
    %9 = arith.mulf %5, %8 : vector<16x128xf32>
    %10 = math.erf %9 : vector<16x128xf32>
    %cst_7 = arith.constant 1.000000e+00 : f32
    %11 = vector.broadcast %cst_7 : f32 to vector<16x128xf32>
    %12 = arith.addf %11, %10 : vector<16x128xf32>
    %13 = arith.mulf %7, %12 : vector<16x128xf32>
    %c0_8 = arith.constant 0 : index
    %c0_9 = arith.constant 0 : index
    %14 = vector.load %arg5[%c0_8, %c0_9] : memref<128x32xf32, #tpu.memory_space<vmem>>, vector<128x32xf32>
    %cst_10 = arith.constant dense<0.000000e+00> : vector<16x32xf32>
    %15 = tpu.matmul %13, %14, %cst_10 {dimension_numbers = #tpu.dot_dimension_numbers<[1], [0], [0], [1], [0, 0, 1, 1], [], []>} : vector<16x128xf32>, vector<128x32xf32>, vector<16x32xf32> -> vector<16x32xf32>
    %c0_i32 = arith.constant 0 : i32
    %16 = arith.cmpi eq, %arg1, %c0_i32 : i32
    %17 = arith.extui %16 : i1 to i32
    %c0_i32_11 = arith.constant 0 : i32
    %18 = arith.cmpi ne, %17, %c0_i32_11 : i32
    scf.if %18 {
      %c0_16 = arith.constant 0 : index
      %c0_17 = arith.constant 0 : index
      %25 = vector.load %arg6[%c0_16, %c0_17] : memref<1x32xf32, #tpu.memory_space<vmem>>, vector<1x32xf32>
      %26 = vector.broadcast %25 : vector<1x32xf32> to vector<16x32xf32>
      %27 = arith.addf %26, %15 : vector<16x32xf32>
      %c0_18 = arith.constant 0 : index
      %c0_19 = arith.constant 0 : index
      %28 = vector.load %arg8[%c0_18, %c0_19] : memref<16x32xf32, #tpu.memory_space<vmem>>, vector<16x32xf32>
      tpu.vector_store %arg8[%c0_18, %c0_19], %27 {strides = array<i32>} : memref<16x32xf32, #tpu.memory_space<vmem>>, vector<16x32xf32>,
    } else {
    }
    %c0_i32_12 = arith.constant 0 : i32
    %19 = arith.cmpi sgt, %arg1, %c0_i32_12 : i32
    %20 = arith.extui %19 : i1 to i32
    %c0_i32_13 = arith.constant 0 : i32
    %21 = arith.cmpi ne, %20, %c0_i32_13 : i32
    scf.if %21 {
      %c0_16 = arith.constant 0 : index
      %c0_17 = arith.constant 0 : index
      %25 = vector.load %arg8[%c0_16, %c0_17] : memref<16x32xf32, #tpu.memory_space<vmem>>, vector<16x32xf32>
      %26 = arith.addf %25, %15 : vector<16x32xf32>
      %c0_18 = arith.constant 0 : index
      %c0_19 = arith.constant 0 : index
      %27 = vector.load %arg8[%c0_18, %c0_19] : memref<16x32xf32, #tpu.memory_space<vmem>>, vector<16x32xf32>
      tpu.vector_store %arg8[%c0_18, %c0_19], %26 {strides = array<i32>} : memref<16x32xf32, #tpu.memory_space<vmem>>, vector<16x32xf32>,
    } else {
    }
    %c0_i32_14 = arith.constant 0 : i32
    %22 = arith.cmpi eq, %arg1, %c0_i32_14 : i32
    %23 = arith.extui %22 : i1 to i32
    %c0_i32_15 = arith.constant 0 : i32
    %24 = arith.cmpi ne, %23, %c0_i32_15 : i32
    scf.if %24 {
      %c0_16 = arith.constant 0 : index
      %c0_17 = arith.constant 0 : index
      %25 = vector.load %arg8[%c0_16, %c0_17] : memref<16x32xf32, #tpu.memory_space<vmem>>, vector<16x32xf32>
      %c0_18 = arith.constant 0 : index
      %c0_19 = arith.constant 0 : index
      %26 = vector.load %arg7[%c0_18, %c0_19] : memref<16x32xf32, #tpu.memory_space<vmem>>, vector<16x32xf32>
      tpu.vector_store %arg7[%c0_18, %c0_19], %25 {strides = array<i32>} : memref<16x32xf32, #tpu.memory_space<vmem>>, vector<16x32xf32>,
    } else {
    }
    return
  }
  func.func @transform_0(%arg0: i32, %arg1: i32) -> (i32, i32) {
    %c0_i32 = arith.constant 0 : i32
    %c0_i32_0 = arith.constant 0 : i32
    return %arg0, %c0_i32 : i32, i32
  }
  func.func @transform_1(%arg0: i32, %arg1: i32) -> (i32, i32) {
    %c0_i32 = arith.constant 0 : i32
    %c0_i32_0 = arith.constant 0 : i32
    return %c0_i32, %arg1 : i32, i32
  }
  func.func @transform_2(%arg0: i32, %arg1: i32) -> (i32, i32) {
    %c0_i32 = arith.constant 0 : i32
    %c0_i32_0 = arith.constant 0 : i32
    return %c0_i32, %arg1 : i32, i32
  }
  func.func @transform_3(%arg0: i32, %arg1: i32) -> (i32, i32) {
    %c0_i32 = arith.constant 0 : i32
    %c0_i32_0 = arith.constant 0 : i32
    return %arg1, %c0_i32 : i32, i32
  }
  func.func @transform_4(%arg0: i32, %arg1: i32) -> (i32, i32) {
    %c0_i32 = arith.constant 0 : i32
    %c0_i32_0 = arith.constant 0 : i32
    %c0_i32_1 = arith.constant 0 : i32
    return %c0_i32, %c0_i32_0 : i32, i32
  }
  func.func @transform_5(%arg0: i32, %arg1: i32) -> (i32, i32) {
    %c0_i32 = arith.constant 0 : i32
    %c0_i32_0 = arith.constant 0 : i32
    return %arg0, %c0_i32 : i32, i32
  }
}

</mosaic_0001>

<llo_original>
// kernel: feed_forward.1
$region0: #{feed_forward.1}
  #allocation0 [shape = 'u32[]', space=smem, size = 0x4, offset = 0x4, fixed_abs, tag = 'smem constant byte address 0x4 - core index']
  #allocation1 [shape = 'u32[144,128]{1,0:T(1,128)}', space=vmem, size = 0x12000, scoped, tag = 'internal scratch']
  #allocation2 [shape = 'f32[16,32]{1,0:T(8,128)}', space=vmem, size = 0x2000, scoped, tag = 'scratch operand']
  %s0 = inlined_call_operand.vmem [shape: f32[16,32], index: 0, kind: input, shape index: {}]
  %s1 = inlined_call_operand.vmem [shape: f32[32,128], index: 1, kind: input, shape index: {}]
  %s2 = inlined_call_operand.vmem [shape: f32[1,128], index: 2, kind: input, shape index: {}]
  %s3 = inlined_call_operand.vmem [shape: f32[128,32], index: 3, kind: input, shape index: {}]
  %s4 = inlined_call_operand.vmem [shape: f32[1,32], index: 4, kind: input, shape index: {}]
  %s5 = inlined_call_operand.hbm [shape: f32[16,32], index: 5, kind: output, shape index: {}]
  %s6 = sld [smem:[#allocation0]]
  $region42: #{feed_forward.1} parent=0
    _
  %s8 = ssub.s32 1, %s6
  %s9 = scalar_select 0, %s8, %s6
  $region1: #{feed_forward.1} parent=0
    #allocation3 [shape = 'u8[8192]{0}', space=vmem, size = 0x2000, scoped, tag = 'output window, operand 0, single buffered']
    #allocation4 [shape = 's32[1]{0}', space=sflag, size = 0x4, scoped, tag = 'scoped memory for feed_forward.1']
    %10 = vsyncpa [#allocation4], 0
    // Predicated region
    $region2: #{feed_forward.1} parent=1 // pred_check
      _
    $region3: #{feed_forward.1} parent=1 // pred_check_branch
      %12 = sbr.rel (0) target = $region5
    $region4: #{feed_forward.1} parent=1 // pred_region
      _
    $region5: #{feed_forward.1} parent=1 // pred_fallthru
      _
    // Predicated region
    $region6: #{feed_forward.1} parent=1 // pred_check
      _
    $region7: #{feed_forward.1} parent=1 // pred_check_branch
      %14 = sbr.rel (0) target = $region9
    $region8: #{feed_forward.1} parent=1 // pred_region
      _
    $region9: #{feed_forward.1} parent=1 // pred_fallthru
      _
    // Predicated region
    $region10: #{feed_forward.1} parent=1 // pred_check
      _
    $region11: #{feed_forward.1} parent=1 // pred_check_branch
      %16 = sbr.rel (0) target = $region13
    $region12: #{feed_forward.1} parent=1 // pred_region
      _
    $region13: #{feed_forward.1} parent=1 // pred_fallthru
      _
    // Predicated region
    $region14: #{feed_forward.1} parent=1 // pred_check
      _
    $region15: #{feed_forward.1} parent=1 // pred_check_branch
      %18 = sbr.rel (0) target = $region17
    $region16: #{feed_forward.1} parent=1 // pred_region
      _
    $region17: #{feed_forward.1} parent=1 // pred_fallthru
      _
    // Predicated region
    $region18: #{feed_forward.1} parent=1 // pred_check
      _
    $region19: #{feed_forward.1} parent=1 // pred_check_branch
      %20 = sbr.rel (0) target = $region21
    $region20: #{feed_forward.1} parent=1 // pred_region
      _
    $region21: #{feed_forward.1} parent=1 // pred_fallthru
      _
    %v21 = vld [vmem:[%s0] sm:$0xff]
    %v22 = vld [vmem:[%s0 + $0x8] sm:$0xff]
    %v23 = vld [vmem:[%s1] sm:$0xff]
    %v24 = vld [vmem:[%s1 + $0x8] sm:$0xff]
    %v25 = vld [vmem:[%s1 + $0x10] sm:$0xff]
    %v26 = vld [vmem:[%s1 + $0x18] sm:$0xff]
    %v27 = vld [vmem:[%s2] sm:$0x1]
    %v29 = vlaneseq
    %v30 = vshrl.u32 %v29, 7
    %v31 = vsub.s32 0, %v30
    %v32 = vrot.slane %v27, %v31
    %vm34 = vcmask 261120
    %v36 = vsel %vm34, %v21, 0
    %v39 = vsel %vm34, %v22, 0
    %41 = vmatprep.subr.mxu0 0.0
    %42 = vmatpush1.msra.mxu0 %v23
    %43 = vmatprep.subr.mxu0 0.0
    %44 = vmatpush1.msra.mxu0 %v24
    %45 = vmatprep.subr.mxu0 0.0
    %46 = vmatpush1.msra.mxu0 %v25
    %47 = vmatprep.subr.mxu0 0.0
    %48 = vmatpush1.msra.mxu0 %v26
    %49 = vmatprep.subr.mxu0 0.0
    %50 = vmatpush1.msra.mxu0 0.0
    %51 = vmatprep.subr.mxu0 0.0
    %52 = vmatpush1.msra.mxu0 0.0
    %53 = vmatprep.subr.mxu0 0.0
    %54 = vmatpush1.msra.mxu0 0.0
    %55 = vmatprep.subr.mxu0 0.0
    %56 = vmatpush1.msra.mxu0 0.0
    %57 = vmatprep.subr.mxu0 0.0
    %58 = vmatpush1.msra.mxu0 0.0
    %59 = vmatprep.subr.mxu0 0.0
    %60 = vmatpush1.msra.mxu0 0.0
    %61 = vmatprep.subr.mxu0 0.0
    %62 = vmatpush1.msra.mxu0 0.0
    %63 = vmatprep.subr.mxu0 0.0
    %64 = vmatpush1.msra.mxu0 0.0
    %65 = vmatprep.subr.mxu0 0.0
    %66 = vmatpush1.msra.mxu0 0.0
    %67 = vmatprep.subr.mxu0 0.0
    %68 = vmatpush1.msra.mxu0 0.0
    %69 = vmatprep.subr.mxu0 0.0
    %70 = vmatpush1.msra.mxu0 0.0
    %71 = vmatprep.subr.mxu0 0.0
    %72 = vmatpush1.msra.mxu0 0.0
    %73 = vmatprep.subr.mxu0 0.0
    %74 = vmatpush1.msra.mxu0 0.0
    %75 = vmatprep.subr.mxu0 0.0
    %76 = vmatpush1.msra.mxu0 0.0
    %77 = vmatprep.subr.mxu0 0.0
    %78 = vmatpush1.msra.mxu0 0.0
    %79 = vmatprep.subr.mxu0 0.0
    %80 = vmatpush1.msra.mxu0 0.0
    %81 = vmatprep.subr.mxu0 0.0
    %82 = vmatpush1.msra.mxu0 0.0
    %83 = vmatprep.subr.mxu0 0.0
    %84 = vmatpush1.msra.mxu0 0.0
    %85 = vmatprep.subr.mxu0 0.0
    %86 = vmatpush1.msra.mxu0 0.0
    %87 = vmatprep.subr.mxu0 0.0
    %88 = vmatpush1.msra.mxu0 0.0
    %89 = vmatprep.subr.mxu0 0.0
    %90 = vmatpush1.msra.mxu0 0.0
    %91 = vmatprep.subr.mxu0 0.0
    %92 = vmatpush1.msra.mxu0 0.0
    %93 = vmatprep.subr.mxu0 0.0
    %94 = vmatpush1.msra.mxu0 0.0
    %95 = vmatprep.subr.mxu0 0.0
    %96 = vmatpush1.msra.mxu0 0.0
    %97 = vmatprep.subr.mxu0 0.0
    %98 = vmatpush1.msra.mxu0 0.0
    %99 = vmatprep.subr.mxu0 0.0
    %100 = vmatpush1.msra.mxu0 0.0
    %101 = vmatprep.subr.mxu0 0.0
    %102 = vmatpush1.msra.mxu0 0.0
    %103 = vmatprep.subr.mxu0 0.0
    %104 = vmatpush1.msra.mxu0 0.0
    %105 = vmatprep.mubr.f32.mxu0 0.0
    %106 = vmatmul.mubr.f32.gmra.mrb[0].mxu0 %v36
    %v107 = vpop.f32.mrb[0].mxu0
    %v108 = vadd.f32 %v32, %v107
    %v109 = vpop.f32.mrb[0].mxu0
    %110 = vmatprep.mubr.f32.mxu0 0.0
    %111 = vmatmul.mubr.f32.gmra.mrb[0].mxu0 %v39
    %v112 = vpop.f32.mrb[0].mxu0
    %v113 = vadd.f32 %v32, %v112
    %v114 = vpop.f32.mrb[0].mxu0
    %115 = vdwg.mxu0
    %v116 = vmul.f32 %v108, 0.5
    %v117 = vmul.f32 %v113, 0.5
    %v118 = vmul.f32 %v108, 0.70710677
    %v119 = vmul.f32 %v113, 0.70710677
    %v120 = verf.f32.pop %v118
    %v121 = verf.f32.pop %v119
    %v122 = vadd.f32 %v120, 1.0
    %v123 = vadd.f32 %v121, 1.0
    %v124 = vmul.f32 %v116, %v122
    %v125 = vmul.f32 %v117, %v123
    %v126 = vld [vmem:[%s3] sm:$0xff]
    %v127 = vld [vmem:[%s3 + $0x8] sm:$0xff]
    %v128 = vld [vmem:[%s3 + $0x10] sm:$0xff]
    %v129 = vld [vmem:[%s3 + $0x18] sm:$0xff]
    %v130 = vld [vmem:[%s3 + $0x20] sm:$0xff]
    %v131 = vld [vmem:[%s3 + $0x28] sm:$0xff]
    %v132 = vld [vmem:[%s3 + $0x30] sm:$0xff]
    %v133 = vld [vmem:[%s3 + $0x38] sm:$0xff]
    %v134 = vld [vmem:[%s3 + $0x40] sm:$0xff]
    %v135 = vld [vmem:[%s3 + $0x48] sm:$0xff]
    %v136 = vld [vmem:[%s3 + $0x50] sm:$0xff]
    %v137 = vld [vmem:[%s3 + $0x58] sm:$0xff]
    %v138 = vld [vmem:[%s3 + $0x60] sm:$0xff]
    %v139 = vld [vmem:[%s3 + $0x68] sm:$0xff]
    %v140 = vld [vmem:[%s3 + $0x70] sm:$0xff]
    %v141 = vld [vmem:[%s3 + $0x78] sm:$0xff]
    %142 = vmatprep.subr.mxu0 0.0
    %143 = vmatpush1.msra.mxu0 %v126
    %144 = vmatprep.subr.mxu0 0.0
    %145 = vmatpush1.msra.mxu0 %v127
    %146 = vmatprep.subr.mxu0 0.0
    %147 = vmatpush1.msra.mxu0 %v128
    %148 = vmatprep.subr.mxu0 0.0
    %149 = vmatpush1.msra.mxu0 %v129
    %150 = vmatprep.subr.mxu0 0.0
    %151 = vmatpush1.msra.mxu0 %v130
    %152 = vmatprep.subr.mxu0 0.0
    %153 = vmatpush1.msra.mxu0 %v131
    %154 = vmatprep.subr.mxu0 0.0
    %155 = vmatpush1.msra.mxu0 %v132
    %156 = vmatprep.subr.mxu0 0.0
    %157 = vmatpush1.msra.mxu0 %v133
    %158 = vmatprep.subr.mxu0 0.0
    %159 = vmatpush1.msra.mxu0 %v134
    %160 = vmatprep.subr.mxu0 0.0
    %161 = vmatpush1.msra.mxu0 %v135
    %162 = vmatprep.subr.mxu0 0.0
    %163 = vmatpush1.msra.mxu0 %v136
    %164 = vmatprep.subr.mxu0 0.0
    %165 = vmatpush1.msra.mxu0 %v137
    %166 = vmatprep.subr.mxu0 0.0
    %167 = vmatpush1.msra.mxu0 %v138
    %168 = vmatprep.subr.mxu0 0.0
    %169 = vmatpush1.msra.mxu0 %v139
    %170 = vmatprep.subr.mxu0 0.0
    %171 = vmatpush1.msra.mxu0 %v140
    %172 = vmatprep.subr.mxu0 0.0
    %173 = vmatpush1.msra.mxu0 %v141
    %174 = vmatprep.subr.mxu0 0.0
    %175 = vmatpush1.msra.mxu0 0.0
    %176 = vmatprep.subr.mxu0 0.0
    %177 = vmatpush1.msra.mxu0 0.0
    %178 = vmatprep.subr.mxu0 0.0
    %179 = vmatpush1.msra.mxu0 0.0
    %180 = vmatprep.subr.mxu0 0.0
    %181 = vmatpush1.msra.mxu0 0.0
    %182 = vmatprep.subr.mxu0 0.0
    %183 = vmatpush1.msra.mxu0 0.0
    %184 = vmatprep.subr.mxu0 0.0
    %185 = vmatpush1.msra.mxu0 0.0
    %186 = vmatprep.subr.mxu0 0.0
    %187 = vmatpush1.msra.mxu0 0.0
    %188 = vmatprep.subr.mxu0 0.0
    %189 = vmatpush1.msra.mxu0 0.0
    %190 = vmatprep.subr.mxu0 0.0
    %191 = vmatpush1.msra.mxu0 0.0
    %192 = vmatprep.subr.mxu0 0.0
    %193 = vmatpush1.msra.mxu0 0.0
    %194 = vmatprep.subr.mxu0 0.0
    %195 = vmatpush1.msra.mxu0 0.0
    %196 = vmatprep.subr.mxu0 0.0
    %197 = vmatpush1.msra.mxu0 0.0
    %198 = vmatprep.subr.mxu0 0.0
    %199 = vmatpush1.msra.mxu0 0.0
    %200 = vmatprep.subr.mxu0 0.0
    %201 = vmatpush1.msra.mxu0 0.0
    %202 = vmatprep.subr.mxu0 0.0
    %203 = vmatpush1.msra.mxu0 0.0
    %204 = vmatprep.subr.mxu0 0.0
    %205 = vmatpush1.msra.mxu0 0.0
    %206 = vmatprep.mubr.f32.mxu0 0.0
    %207 = vmatmul.mubr.f32.gmra.mrb[0].mxu0 %v124
    %v208 = vpop.f32.mrb[0].mxu0
    %v209 = vadd.f32 0.0, %v208
    %v210 = vpop.f32.mrb[0].mxu0
    %211 = vmatprep.mubr.f32.mxu0 0.0
    %212 = vmatmul.mubr.f32.gmra.mrb[0].mxu0 %v125
    %v213 = vpop.f32.mrb[0].mxu0
    %v214 = vadd.f32 0.0, %v213
    %v215 = vpop.f32.mrb[0].mxu0
    %216 = vdwg.mxu0
    %p217 = scmp.eq.s32.totalorder 0, 0
    // Predicated region
    $region22: #{feed_forward.1} parent=1 // pred_check
      %p218 = pneg %p217
    $region23: #{feed_forward.1} parent=1 // pred_check_branch
      %220 = sbr.rel (%p218) target = $region25
    $region24: #{feed_forward.1} parent=1 // pred_region
      %v221 = vld [vmem:[%s4] sm:$0x1]
      %v223 = vlaneseq
      %v224 = vshrl.u32 %v223, 7
      %v225 = vsub.s32 0, %v224
      %v226 = vrot.slane %v221, %v225
      %v228 = vadd.f32 %v226, %v209
      %v229 = vadd.f32 %v226, %v214
      %230 = vst.msk [vmem:[#allocation2] sm:$0xff] %vm34, %v228
      %231 = vst.msk [vmem:[#allocation2 + $0x8] sm:$0xff] %vm34, %v229
    $region25: #{feed_forward.1} parent=1 // pred_fallthru
      _
    %p232 = scmp.gt.s32.totalorder 0, 0
    // Predicated region
    $region26: #{feed_forward.1} parent=1 // pred_check
      %p233 = pneg %p232
    $region27: #{feed_forward.1} parent=1 // pred_check_branch
      %235 = sbr.rel (%p233) target = $region29
    $region28: #{feed_forward.1} parent=1 // pred_region
      %v236 = vld [vmem:[#allocation2] sm:$0xff]
      %v237 = vld [vmem:[#allocation2 + $0x8] sm:$0xff]
      %v238 = vadd.f32 %v236, %v209
      %v239 = vadd.f32 %v237, %v214
      %240 = vst.msk [vmem:[#allocation2] sm:$0xff] %vm34, %v238
      %241 = vst.msk [vmem:[#allocation2 + $0x8] sm:$0xff] %vm34, %v239
    $region29: #{feed_forward.1} parent=1 // pred_fallthru
      _
    // Predicated region
    $region30: #{feed_forward.1} parent=1 // pred_check
      %p242 = pneg %p217
    $region31: #{feed_forward.1} parent=1 // pred_check_branch
      %244 = sbr.rel (%p242) target = $region33
    $region32: #{feed_forward.1} parent=1 // pred_region
      %v245 = vld [vmem:[#allocation2] sm:$0xff]
      %v246 = vld [vmem:[#allocation2 + $0x8] sm:$0xff]
      %247 = vst.msk [vmem:[#allocation3] sm:$0xff] %vm34, %v245
      %248 = vst.msk [vmem:[#allocation3 + $0x8] sm:$0xff] %vm34, %v246
    $region33: #{feed_forward.1} parent=1 // pred_fallthru
      _
    // Predicated region
    $region34: #{feed_forward.1} parent=1 // pred_check
      _
    $region35: #{feed_forward.1} parent=1 // pred_check_branch
      %250 = sbr.rel (0) target = $region37
    $region36: #{feed_forward.1} parent=1 // pred_region
      %s252 = ssub.s32 256, 256
      %253 = vsyncadd [#allocation4], %s252
      %s254 = sshll.u32 [#allocation3], 4
      %s255 = int_to_ptr.vmem [resolvable:$true] %s254
      %260 = dma.vmem_to_hbm [thread:$0]  %s255, 256, %s5, [#allocation4], 128, 128, 8
    $region37: #{feed_forward.1} parent=1 // pred_fallthru
      _
    // Predicated region
    $region38: #{feed_forward.1} parent=1 // pred_check
      _
    $region39: #{feed_forward.1} parent=1 // pred_check_branch
      %262 = sbr.rel (0) target = $region41
    $region40: #{feed_forward.1} parent=1 // pred_region
      %263 = dma.done [#allocation4], 256
    $region41: #{feed_forward.1} parent=1 // pred_fallthru
      _
    %264 = vsyncpa [#allocation4], 1

</llo_original>
